<compile_context>
chip_gen: v5e
topology: v5e:2x2
jax: 0.10.0
libtpu: 0.0.40
codegen_flags: <defaults>
</compile_context>

<pallas_src>
import jax
import jax.numpy as jnp
import numpy as np
from jax.experimental import pallas as pl
from jax.experimental.pallas import tpu as pltpu

HIDDEN_SIZE = 32
NUM_LAYERS = 1
BIDIRECTIONAL = False


def _lstm_fused_kernel(x_ref, h0_ref, c0_ref, wih_ref, whh_ref, bias_ref,
                       out_ref, hn_ref, cn_ref):
    """Fused LSTM forward: input projection + recurrence in one kernel.

    x_ref    : (B, T, H)   batch-first input (as the PyTorch module sees it)
    h0/c0    : (1, B, H)   initial states (num_layers = 1)
    wih_ref  : (H, 4H)     W_ih^T   (PyTorch gate order [i, f, g, o])
    whh_ref  : (H, 4H)     W_hh^T
    bias_ref : (1, 4H)     b_ih + b_hh
    out_ref  : (B, T, H)   h_t for every step, batch-first (no wrapper transpose)
    hn/cn    : (1, B, H)   final states
    """
    B, T, H = out_ref.shape
    G = 4 * H

    wih = wih_ref[...]                                   # (H, 4H), stays in vregs
    whh = whh_ref[...]                                   # (H, 4H), stays in vregs
    bias = bias_ref[...]                                 # (1, 4H)

    # ---- Input projection for all timesteps: one MXU matmul, off the chain.
    # (B,T,H) -> (B*T,H) is a layout no-op (leading dims collapse into sublanes).
    x2d = x_ref[...].astype(jnp.float32).reshape(B * T, H)            # (B*T, H)
    pre = jnp.dot(x2d, wih, preferred_element_type=jnp.float32) + bias  # (B*T, 4H)
    pre3 = pre.reshape(B, T, G)                                        # (B, T, 4H)

    # ---- Recurrence: h/c carried in vregs; only h @ W_hh^T is serial.
    h = h0_ref[0].astype(jnp.float32)                    # (B, H) f32 carry
    c = c0_ref[0].astype(jnp.float32)                    # (B, H) f32 carry

    for t in range(T):                                   # static full unroll (T=8)
        gates = (jnp.dot(h, whh, preferred_element_type=jnp.float32)
                 + pre3[:, t, :])                        # (B, 4H)

        # Full 128-lane transcendentals (EUP slot), then slice the four gates.
        sig = jax.nn.sigmoid(gates)
        th = jnp.tanh(gates)
        i_g = sig[:, 0 * H:1 * H]
        f_g = sig[:, 1 * H:2 * H]
        g_g = th[:, 2 * H:3 * H]
        o_g = sig[:, 3 * H:4 * H]

        c = f_g * c + i_g * g_g
        h = o_g * jnp.tanh(c)

        # Batch-major store; 32-lane masked store is negligible (2 KB total)
        # and sits off the serial dependency chain.
        out_ref[:, t:t + 1, :] = h[:, None, :].astype(out_ref.dtype)

    hn_ref[...] = h[None].astype(hn_ref.dtype)
    cn_ref[...] = c[None].astype(cn_ref.dtype)


@jax.jit
def lstm_text_encoder_forward(x, h0, c0, w_ih, w_hh, b_ih, b_hh):
    """Pallas equivalent of LSTMTextEncoder.forward(x, h, c).

    x  : (B, T, H)  float32 (batch_first, like the PyTorch module)
    h0 : (1, B, H)  c0 : (1, B, H)
    w_ih, w_hh : (4H, H);  b_ih, b_hh : (4H,)
    Returns (output (B, T, H), (h_n (1, B, H), c_n (1, B, H))).
    """
    B, T, H = x.shape
    G = 4 * H

    # Weight-only preprocessing (tiny, x-independent): W^T and combined bias.
    wih_t = jnp.transpose(w_ih)                          # (H, 4H)
    whh_t = jnp.transpose(w_hh)                          # (H, 4H)
    bias = (b_ih + b_hh).reshape(1, G)                   # (1, 4H)

    out, h_n, c_n = pl.pallas_call(
        _lstm_fused_kernel,
        out_shape=(
            jax.ShapeDtypeStruct((B, T, H), x.dtype),
            jax.ShapeDtypeStruct((1, B, H), x.dtype),
            jax.ShapeDtypeStruct((1, B, H), x.dtype),
        ),
        grid_spec=pltpu.PrefetchScalarGridSpec(
            num_scalar_prefetch=0,
            grid=(1,),                                   # single invocation
            in_specs=[
                pl.BlockSpec((B, T, H), lambda i: (0, 0, 0)),   # x
                pl.BlockSpec((1, B, H), lambda i: (0, 0, 0)),   # h0
                pl.BlockSpec((1, B, H), lambda i: (0, 0, 0)),   # c0
                pl.BlockSpec((H, G), lambda i: (0, 0)),         # W_ih^T
                pl.BlockSpec((H, G), lambda i: (0, 0)),         # W_hh^T
                pl.BlockSpec((1, G), lambda i: (0, 0)),         # bias
            ],
            out_specs=[
                pl.BlockSpec((B, T, H), lambda i: (0, 0, 0)),   # output
                pl.BlockSpec((1, B, H), lambda i: (0, 0, 0)),   # h_n
                pl.BlockSpec((1, B, H), lambda i: (0, 0, 0)),   # c_n
            ],
        ),
        compiler_params=pltpu.CompilerParams(
            dimension_semantics=("arbitrary",),
        ),
    )(x, h0, c0, wih_t, whh_t, bias)

    return out, (h_n, c_n)


def _reference_lstm(x, h0, c0, w_ih, w_hh, b_ih, b_hh):
    """Pure-JAX reference matching torch.nn.LSTM semantics (gate order i,f,g,o)."""
    B, T, H = x.shape

    def step(carry, x_t):
        h, c = carry
        gates = x_t @ w_ih.T + b_ih + h @ w_hh.T + b_hh
        i = jax.nn.sigmoid(gates[:, 0 * H:1 * H])
        f = jax.nn.sigmoid(gates[:, 1 * H:2 * H])
        g = jnp.tanh(gates[:, 2 * H:3 * H])
        o = jax.nn.sigmoid(gates[:, 3 * H:4 * H])
        c_new = f * c + i * g
        h_new = o * jnp.tanh(c_new)
        return (h_new, c_new), h_new

    (h_n, c_n), out_tm = jax.lax.scan(step, (h0[0], c0[0]),
                                      jnp.transpose(x, (1, 0, 2)))
    return jnp.transpose(out_tm, (1, 0, 2)), (h_n[None], c_n[None])


if __name__ == "__main__":
    B, T, H = 2, 8, HIDDEN_SIZE
    key = jax.random.PRNGKey(0)
    kx, kh, kc, k1, k2, k3, k4 = jax.random.split(key, 7)

    # Deterministic "PyTorch-like" init: U(-1/sqrt(H), 1/sqrt(H)).
    bound = 1.0 / np.sqrt(H)
    w_ih = jax.random.uniform(k1, (4 * H, H), jnp.float32, -bound, bound)
    w_hh = jax.random.uniform(k2, (4 * H, H), jnp.float32, -bound, bound)
    b_ih = jax.random.uniform(k3, (4 * H,), jnp.float32, -bound, bound)
    b_hh = jax.random.uniform(k4, (4 * H,), jnp.float32, -bound, bound)

    x = jax.random.normal(kx, (B, T, H), jnp.float32)
    h0 = jax.random.normal(kh, (NUM_LAYERS, B, H), jnp.float32)
    c0 = jax.random.normal(kc, (NUM_LAYERS, B, H), jnp.float32)

    out, (h_n, c_n) = lstm_text_encoder_forward(x, h0, c0, w_ih, w_hh, b_ih, b_hh)
    jax.block_until_ready((out, h_n, c_n))

    ref_out, (ref_h, ref_c) = _reference_lstm(x, h0, c0, w_ih, w_hh, b_ih, b_hh)
    np.testing.assert_allclose(np.asarray(out), np.asarray(ref_out), rtol=1e-5, atol=1e-5)
    np.testing.assert_allclose(np.asarray(h_n), np.asarray(ref_h), rtol=1e-5, atol=1e-5)
    np.testing.assert_allclose(np.asarray(c_n), np.asarray(ref_c), rtol=1e-5, atol=1e-5)

    print("KERNEL_OK")
</pallas_src>

<mosaic_0001>
module attributes {stable_mosaic.version = 11 : i64} {
  func.func @_lstm_fused_kernel(%arg0: i32, %arg1: memref<2x8x32xf32, #tpu.memory_space<vmem>>, %arg2: memref<1x2x32xf32, #tpu.memory_space<vmem>>, %arg3: memref<1x2x32xf32, #tpu.memory_space<vmem>>, %arg4: memref<32x128xf32, #tpu.memory_space<vmem>>, %arg5: memref<32x128xf32, #tpu.memory_space<vmem>>, %arg6: memref<1x128xf32, #tpu.memory_space<vmem>>, %arg7: memref<2x8x32xf32, #tpu.memory_space<vmem>>, %arg8: memref<1x2x32xf32, #tpu.memory_space<vmem>>, %arg9: memref<1x2x32xf32, #tpu.memory_space<vmem>>) attributes {dimension_semantics = [#tpu.dimension_semantics<arbitrary>], iteration_bounds = array<i64: 1>, scalar_prefetch = 0 : i64, scratch_operands = 0 : i64, tpu.core_type = #tpu.core_type<tc>, window_params = [{pipeline_mode = #tpu.pipeline_mode<synchronous>, transform_indices = @transform_0, window_bounds = array<i64: 2, 8, 32>}, {pipeline_mode = #tpu.pipeline_mode<synchronous>, transform_indices = @transform_1, window_bounds = array<i64: 1, 2, 32>}, {pipeline_mode = #tpu.pipeline_mode<synchronous>, transform_indices = @transform_2, window_bounds = array<i64: 1, 2, 32>}, {pipeline_mode = #tpu.pipeline_mode<synchronous>, transform_indices = @transform_3, window_bounds = array<i64: 32, 128>}, {pipeline_mode = #tpu.pipeline_mode<synchronous>, transform_indices = @transform_4, window_bounds = array<i64: 32, 128>}, {pipeline_mode = #tpu.pipeline_mode<synchronous>, transform_indices = @transform_5, window_bounds = array<i64: 1, 128>}, {pipeline_mode = #tpu.pipeline_mode<synchronous>, transform_indices = @transform_6, window_bounds = array<i64: 2, 8, 32>}, {pipeline_mode = #tpu.pipeline_mode<synchronous>, transform_indices = @transform_7, window_bounds = array<i64: 1, 2, 32>}, {pipeline_mode = #tpu.pipeline_mode<synchronous>, transform_indices = @transform_8, window_bounds = array<i64: 1, 2, 32>}]} {
    %c0 = arith.constant 0 : index
    %c0_0 = arith.constant 0 : index
    %0 = vector.load %arg4[%c0, %c0_0] : memref<32x128xf32, #tpu.memory_space<vmem>>, vector<32x128xf32>
    %c0_1 = arith.constant 0 : index
    %c0_2 = arith.constant 0 : index
    %1 = vector.load %arg5[%c0_1, %c0_2] : memref<32x128xf32, #tpu.memory_space<vmem>>, vector<32x128xf32>
    %c0_3 = arith.constant 0 : index
    %c0_4 = arith.constant 0 : index
    %2 = vector.load %arg6[%c0_3, %c0_4] : memref<1x128xf32, #tpu.memory_space<vmem>>, vector<1x128xf32>
    %c0_5 = arith.constant 0 : index
    %c0_6 = arith.constant 0 : index
    %c0_7 = arith.constant 0 : index
    %3 = vector.load %arg1[%c0_5, %c0_6, %c0_7] : memref<2x8x32xf32, #tpu.memory_space<vmem>>, vector<2x8x32xf32>
    %4 = vector.shape_cast %3 : vector<2x8x32xf32> to vector<16x32xf32>
    %cst = arith.constant dense<0.000000e+00> : vector<16x128xf32>
    %5 = tpu.matmul %4, %0, %cst {dimension_numbers = #tpu.dot_dimension_numbers<[1], [0], [0], [1], [0, 0, 1, 1], [], []>} : vector<16x32xf32>, vector<32x128xf32>, vector<16x128xf32> -> vector<16x128xf32>
    %6 = vector.broadcast %2 : vector<1x128xf32> to vector<16x128xf32>
    %7 = arith.addf %5, %6 : vector<16x128xf32>
    %8 = vector.shape_cast %7 : vector<16x128xf32> to vector<2x8x128xf32>
    %c0_8 = arith.constant 0 : index
    %c0_9 = arith.constant 0 : index
    %c0_10 = arith.constant 0 : index
    %9 = vector.load %arg2[%c0_8, %c0_9, %c0_10] : memref<1x2x32xf32, #tpu.memory_space<vmem>>, vector<1x2x32xf32>
    %10 = vector.shape_cast %9 : vector<1x2x32xf32> to vector<2x32xf32>
    %c0_11 = arith.constant 0 : index
    %c0_12 = arith.constant 0 : index
    %c0_13 = arith.constant 0 : index
    %11 = vector.load %arg3[%c0_11, %c0_12, %c0_13] : memref<1x2x32xf32, #tpu.memory_space<vmem>>, vector<1x2x32xf32>
    %12 = vector.shape_cast %11 : vector<1x2x32xf32> to vector<2x32xf32>
    %cst_14 = arith.constant dense<0.000000e+00> : vector<2x128xf32>
    %13 = tpu.matmul %10, %1, %cst_14 {dimension_numbers = #tpu.dot_dimension_numbers<[1], [0], [0], [1], [0, 0, 1, 1], [], []>} : vector<2x32xf32>, vector<32x128xf32>, vector<2x128xf32> -> vector<2x128xf32>
    %14 = vector.extract_strided_slice %8 {offsets = [0, 0, 0], sizes = [2, 1, 128], strides = [1, 1, 1]} : vector<2x8x128xf32> to vector<2x1x128xf32>
    %15 = vector.shape_cast %14 : vector<2x1x128xf32> to vector<2x128xf32>
    %16 = arith.addf %13, %15 : vector<2x128xf32>
    %17 = arith.negf %16 : vector<2x128xf32>
    %18 = math.exp %17 : vector<2x128xf32>
    %cst_15 = arith.constant 1.000000e+00 : f32
    %19 = vector.broadcast %cst_15 : f32 to vector<2x128xf32>
    %20 = arith.addf %19, %18 : vector<2x128xf32>
    %21 = arith.divf %19, %20 : vector<2x128xf32>
    %22 = math.tanh %16 : vector<2x128xf32>
    %23 = vector.extract_strided_slice %21 {offsets = [0, 0], sizes = [2, 32], strides = [1, 1]} : vector<2x128xf32> to vector<2x32xf32>
    %24 = vector.extract_strided_slice %21 {offsets = [0, 32], sizes = [2, 32], strides = [1, 1]} : vector<2x128xf32> to vector<2x32xf32>
    %25 = vector.extract_strided_slice %22 {offsets = [0, 64], sizes = [2, 32], strides = [1, 1]} : vector<2x128xf32> to vector<2x32xf32>
    %26 = vector.extract_strided_slice %21 {offsets = [0, 96], sizes = [2, 32], strides = [1, 1]} : vector<2x128xf32> to vector<2x32xf32>
    %27 = arith.mulf %24, %12 : vector<2x32xf32>
    %28 = arith.mulf %23, %25 : vector<2x32xf32>
    %29 = arith.addf %27, %28 : vector<2x32xf32>
    %30 = math.tanh %29 : vector<2x32xf32>
    %31 = arith.mulf %26, %30 : vector<2x32xf32>
    %32 = vector.shape_cast %31 : vector<2x32xf32> to vector<2x1x32xf32>
    %c0_16 = arith.constant 0 : index
    %c0_17 = arith.constant 0 : index
    %c0_18 = arith.constant 0 : index
    %33 = vector.load %arg7[%c0_16, %c0_17, %c0_18] : memref<2x8x32xf32, #tpu.memory_space<vmem>>, vector<2x1x32xf32>
    tpu.vector_store %arg7[%c0_16, %c0_17, %c0_18], %32 {strides = array<i32>} : memref<2x8x32xf32, #tpu.memory_space<vmem>>, vector<2x1x32xf32>,
    %cst_19 = arith.constant dense<0.000000e+00> : vector<2x128xf32>
    %34 = tpu.matmul %31, %1, %cst_19 {dimension_numbers = #tpu.dot_dimension_numbers<[1], [0], [0], [1], [0, 0, 1, 1], [], []>} : vector<2x32xf32>, vector<32x128xf32>, vector<2x128xf32> -> vector<2x128xf32>
    %35 = vector.extract_strided_slice %8 {offsets = [0, 1, 0], sizes = [2, 1, 128], strides = [1, 1, 1]} : vector<2x8x128xf32> to vector<2x1x128xf32>
    %36 = vector.shape_cast %35 : vector<2x1x128xf32> to vector<2x128xf32>
    %37 = arith.addf %34, %36 : vector<2x128xf32>
    %38 = arith.negf %37 : vector<2x128xf32>
    %39 = math.exp %38 : vector<2x128xf32>
    %cst_20 = arith.constant 1.000000e+00 : f32
    %40 = vector.broadcast %cst_20 : f32 to vector<2x128xf32>
    %41 = arith.addf %40, %39 : vector<2x128xf32>
    %42 = arith.divf %40, %41 : vector<2x128xf32>
    %43 = math.tanh %37 : vector<2x128xf32>
    %44 = vector.extract_strided_slice %42 {offsets = [0, 0], sizes = [2, 32], strides = [1, 1]} : vector<2x128xf32> to vector<2x32xf32>
    %45 = vector.extract_strided_slice %42 {offsets = [0, 32], sizes = [2, 32], strides = [1, 1]} : vector<2x128xf32> to vector<2x32xf32>
    %46 = vector.extract_strided_slice %43 {offsets = [0, 64], sizes = [2, 32], strides = [1, 1]} : vector<2x128xf32> to vector<2x32xf32>
    %47 = vector.extract_strided_slice %42 {offsets = [0, 96], sizes = [2, 32], strides = [1, 1]} : vector<2x128xf32> to vector<2x32xf32>
    %48 = arith.mulf %45, %29 : vector<2x32xf32>
    %49 = arith.mulf %44, %46 : vector<2x32xf32>
    %50 = arith.addf %48, %49 : vector<2x32xf32>
    %51 = math.tanh %50 : vector<2x32xf32>
    %52 = arith.mulf %47, %51 : vector<2x32xf32>
    %53 = vector.shape_cast %52 : vector<2x32xf32> to vector<2x1x32xf32>
    %c0_21 = arith.constant 0 : index
    %c1 = arith.constant 1 : index
    %c0_22 = arith.constant 0 : index
    %54 = vector.load %arg7[%c0_21, %c1, %c0_22] : memref<2x8x32xf32, #tpu.memory_space<vmem>>, vector<2x1x32xf32>
    tpu.vector_store %arg7[%c0_21, %c1, %c0_22], %53 {strides = array<i32>} : memref<2x8x32xf32, #tpu.memory_space<vmem>>, vector<2x1x32xf32>,
    %cst_23 = arith.constant dense<0.000000e+00> : vector<2x128xf32>
    %55 = tpu.matmul %52, %1, %cst_23 {dimension_numbers = #tpu.dot_dimension_numbers<[1], [0], [0], [1], [0, 0, 1, 1], [], []>} : vector<2x32xf32>, vector<32x128xf32>, vector<2x128xf32> -> vector<2x128xf32>
    %56 = vector.extract_strided_slice %8 {offsets = [0, 2, 0], sizes = [2, 1, 128], strides = [1, 1, 1]} : vector<2x8x128xf32> to vector<2x1x128xf32>
    %57 = vector.shape_cast %56 : vector<2x1x128xf32> to vector<2x128xf32>
    %58 = arith.addf %55, %57 : vector<2x128xf32>
    %59 = arith.negf %58 : vector<2x128xf32>
    %60 = math.exp %59 : vector<2x128xf32>
    %cst_24 = arith.constant 1.000000e+00 : f32
    %61 = vector.broadcast %cst_24 : f32 to vector<2x128xf32>
    %62 = arith.addf %61, %60 : vector<2x128xf32>
    %63 = arith.divf %61, %62 : vector<2x128xf32>
    %64 = math.tanh %58 : vector<2x128xf32>
    %65 = vector.extract_strided_slice %63 {offsets = [0, 0], sizes = [2, 32], strides = [1, 1]} : vector<2x128xf32> to vector<2x32xf32>
    %66 = vector.extract_strided_slice %63 {offsets = [0, 32], sizes = [2, 32], strides = [1, 1]} : vector<2x128xf32> to vector<2x32xf32>
    %67 = vector.extract_strided_slice %64 {offsets = [0, 64], sizes = [2, 32], strides = [1, 1]} : vector<2x128xf32> to vector<2x32xf32>
    %68 = vector.extract_strided_slice %63 {offsets = [0, 96], sizes = [2, 32], strides = [1, 1]} : vector<2x128xf32> to vector<2x32xf32>
    %69 = arith.mulf %66, %50 : vector<2x32xf32>
    %70 = arith.mulf %65, %67 : vector<2x32xf32>
    %71 = arith.addf %69, %70 : vector<2x32xf32>
    %72 = math.tanh %71 : vector<2x32xf32>
    %73 = arith.mulf %68, %72 : vector<2x32xf32>
    %74 = vector.shape_cast %73 : vector<2x32xf32> to vector<2x1x32xf32>
    %c0_25 = arith.constant 0 : index
    %c2 = arith.constant 2 : index
    %c0_26 = arith.constant 0 : index
    %75 = vector.load %arg7[%c0_25, %c2, %c0_26] : memref<2x8x32xf32, #tpu.memory_space<vmem>>, vector<2x1x32xf32>
    tpu.vector_store %arg7[%c0_25, %c2, %c0_26], %74 {strides = array<i32>} : memref<2x8x32xf32, #tpu.memory_space<vmem>>, vector<2x1x32xf32>,
    %cst_27 = arith.constant dense<0.000000e+00> : vector<2x128xf32>
    %76 = tpu.matmul %73, %1, %cst_27 {dimension_numbers = #tpu.dot_dimension_numbers<[1], [0], [0], [1], [0, 0, 1, 1], [], []>} : vector<2x32xf32>, vector<32x128xf32>, vector<2x128xf32> -> vector<2x128xf32>
    %77 = vector.extract_strided_slice %8 {offsets = [0, 3, 0], sizes = [2, 1, 128], strides = [1, 1, 1]} : vector<2x8x128xf32> to vector<2x1x128xf32>
    %78 = vector.shape_cast %77 : vector<2x1x128xf32> to vector<2x128xf32>
    %79 = arith.addf %76, %78 : vector<2x128xf32>
    %80 = arith.negf %79 : vector<2x128xf32>
    %81 = math.exp %80 : vector<2x128xf32>
    %cst_28 = arith.constant 1.000000e+00 : f32
    %82 = vector.broadcast %cst_28 : f32 to vector<2x128xf32>
    %83 = arith.addf %82, %81 : vector<2x128xf32>
    %84 = arith.divf %82, %83 : vector<2x128xf32>
    %85 = math.tanh %79 : vector<2x128xf32>
    %86 = vector.extract_strided_slice %84 {offsets = [0, 0], sizes = [2, 32], strides = [1, 1]} : vector<2x128xf32> to vector<2x32xf32>
    %87 = vector.extract_strided_slice %84 {offsets = [0, 32], sizes = [2, 32], strides = [1, 1]} : vector<2x128xf32> to vector<2x32xf32>
    %88 = vector.extract_strided_slice %85 {offsets = [0, 64], sizes = [2, 32], strides = [1, 1]} : vector<2x128xf32> to vector<2x32xf32>
    %89 = vector.extract_strided_slice %84 {offsets = [0, 96], sizes = [2, 32], strides = [1, 1]} : vector<2x128xf32> to vector<2x32xf32>
    %90 = arith.mulf %87, %71 : vector<2x32xf32>
    %91 = arith.mulf %86, %88 : vector<2x32xf32>
    %92 = arith.addf %90, %91 : vector<2x32xf32>
    %93 = math.tanh %92 : vector<2x32xf32>
    %94 = arith.mulf %89, %93 : vector<2x32xf32>
    %95 = vector.shape_cast %94 : vector<2x32xf32> to vector<2x1x32xf32>
    %c0_29 = arith.constant 0 : index
    %c3 = arith.constant 3 : index
    %c0_30 = arith.constant 0 : index
    %96 = vector.load %arg7[%c0_29, %c3, %c0_30] : memref<2x8x32xf32, #tpu.memory_space<vmem>>, vector<2x1x32xf32>
    tpu.vector_store %arg7[%c0_29, %c3, %c0_30], %95 {strides = array<i32>} : memref<2x8x32xf32, #tpu.memory_space<vmem>>, vector<2x1x32xf32>,
    %cst_31 = arith.constant dense<0.000000e+00> : vector<2x128xf32>
    %97 = tpu.matmul %94, %1, %cst_31 {dimension_numbers = #tpu.dot_dimension_numbers<[1], [0], [0], [1], [0, 0, 1, 1], [], []>} : vector<2x32xf32>, vector<32x128xf32>, vector<2x128xf32> -> vector<2x128xf32>
    %98 = vector.extract_strided_slice %8 {offsets = [0, 4, 0], sizes = [2, 1, 128], strides = [1, 1, 1]} : vector<2x8x128xf32> to vector<2x1x128xf32>
    %99 = vector.shape_cast %98 : vector<2x1x128xf32> to vector<2x128xf32>
    %100 = arith.addf %97, %99 : vector<2x128xf32>
    %101 = arith.negf %100 : vector<2x128xf32>
    %102 = math.exp %101 : vector<2x128xf32>
    %cst_32 = arith.constant 1.000000e+00 : f32
    %103 = vector.broadcast %cst_32 : f32 to vector<2x128xf32>
    %104 = arith.addf %103, %102 : vector<2x128xf32>
    %105 = arith.divf %103, %104 : vector<2x128xf32>
    %106 = math.tanh %100 : vector<2x128xf32>
    %107 = vector.extract_strided_slice %105 {offsets = [0, 0], sizes = [2, 32], strides = [1, 1]} : vector<2x128xf32> to vector<2x32xf32>
    %108 = vector.extract_strided_slice %105 {offsets = [0, 32], sizes = [2, 32], strides = [1, 1]} : vector<2x128xf32> to vector<2x32xf32>
    %109 = vector.extract_strided_slice %106 {offsets = [0, 64], sizes = [2, 32], strides = [1, 1]} : vector<2x128xf32> to vector<2x32xf32>
    %110 = vector.extract_strided_slice %105 {offsets = [0, 96], sizes = [2, 32], strides = [1, 1]} : vector<2x128xf32> to vector<2x32xf32>
    %111 = arith.mulf %108, %92 : vector<2x32xf32>
    %112 = arith.mulf %107, %109 : vector<2x32xf32>
    %113 = arith.addf %111, %112 : vector<2x32xf32>
    %114 = math.tanh %113 : vector<2x32xf32>
    %115 = arith.mulf %110, %114 : vector<2x32xf32>
    %116 = vector.shape_cast %115 : vector<2x32xf32> to vector<2x1x32xf32>
    %c0_33 = arith.constant 0 : index
    %c4 = arith.constant 4 : index
    %c0_34 = arith.constant 0 : index
    %117 = vector.load %arg7[%c0_33, %c4, %c0_34] : memref<2x8x32xf32, #tpu.memory_space<vmem>>, vector<2x1x32xf32>
    tpu.vector_store %arg7[%c0_33, %c4, %c0_34], %116 {strides = array<i32>} : memref<2x8x32xf32, #tpu.memory_space<vmem>>, vector<2x1x32xf32>,
    %cst_35 = arith.constant dense<0.000000e+00> : vector<2x128xf32>
    %118 = tpu.matmul %115, %1, %cst_35 {dimension_numbers = #tpu.dot_dimension_numbers<[1], [0], [0], [1], [0, 0, 1, 1], [], []>} : vector<2x32xf32>, vector<32x128xf32>, vector<2x128xf32> -> vector<2x128xf32>
    %119 = vector.extract_strided_slice %8 {offsets = [0, 5, 0], sizes = [2, 1, 128], strides = [1, 1, 1]} : vector<2x8x128xf32> to vector<2x1x128xf32>
    %120 = vector.shape_cast %119 : vector<2x1x128xf32> to vector<2x128xf32>
    %121 = arith.addf %118, %120 : vector<2x128xf32>
    %122 = arith.negf %121 : vector<2x128xf32>
    %123 = math.exp %122 : vector<2x128xf32>
    %cst_36 = arith.constant 1.000000e+00 : f32
    %124 = vector.broadcast %cst_36 : f32 to vector<2x128xf32>
    %125 = arith.addf %124, %123 : vector<2x128xf32>
    %126 = arith.divf %124, %125 : vector<2x128xf32>
    %127 = math.tanh %121 : vector<2x128xf32>
    %128 = vector.extract_strided_slice %126 {offsets = [0, 0], sizes = [2, 32], strides = [1, 1]} : vector<2x128xf32> to vector<2x32xf32>
    %129 = vector.extract_strided_slice %126 {offsets = [0, 32], sizes = [2, 32], strides = [1, 1]} : vector<2x128xf32> to vector<2x32xf32>
    %130 = vector.extract_strided_slice %127 {offsets = [0, 64], sizes = [2, 32], strides = [1, 1]} : vector<2x128xf32> to vector<2x32xf32>
    %131 = vector.extract_strided_slice %126 {offsets = [0, 96], sizes = [2, 32], strides = [1, 1]} : vector<2x128xf32> to vector<2x32xf32>
    %132 = arith.mulf %129, %113 : vector<2x32xf32>
    %133 = arith.mulf %128, %130 : vector<2x32xf32>
    %134 = arith.addf %132, %133 : vector<2x32xf32>
    %135 = math.tanh %134 : vector<2x32xf32>
    %136 = arith.mulf %131, %135 : vector<2x32xf32>
    %137 = vector.shape_cast %136 : vector<2x32xf32> to vector<2x1x32xf32>
    %c0_37 = arith.constant 0 : index
    %c5 = arith.constant 5 : index
    %c0_38 = arith.constant 0 : index
    %138 = vector.load %arg7[%c0_37, %c5, %c0_38] : memref<2x8x32xf32, #tpu.memory_space<vmem>>, vector<2x1x32xf32>
    tpu.vector_store %arg7[%c0_37, %c5, %c0_38], %137 {strides = array<i32>} : memref<2x8x32xf32, #tpu.memory_space<vmem>>, vector<2x1x32xf32>,
    %cst_39 = arith.constant dense<0.000000e+00> : vector<2x128xf32>
    %139 = tpu.matmul %136, %1, %cst_39 {dimension_numbers = #tpu.dot_dimension_numbers<[1], [0], [0], [1], [0, 0, 1, 1], [], []>} : vector<2x32xf32>, vector<32x128xf32>, vector<2x128xf32> -> vector<2x128xf32>
    %140 = vector.extract_strided_slice %8 {offsets = [0, 6, 0], sizes = [2, 1, 128], strides = [1, 1, 1]} : vector<2x8x128xf32> to vector<2x1x128xf32>
    %141 = vector.shape_cast %140 : vector<2x1x128xf32> to vector<2x128xf32>
    %142 = arith.addf %139, %141 : vector<2x128xf32>
    %143 = arith.negf %142 : vector<2x128xf32>
    %144 = math.exp %143 : vector<2x128xf32>
    %cst_40 = arith.constant 1.000000e+00 : f32
    %145 = vector.broadcast %cst_40 : f32 to vector<2x128xf32>
    %146 = arith.addf %145, %144 : vector<2x128xf32>
    %147 = arith.divf %145, %146 : vector<2x128xf32>
    %148 = math.tanh %142 : vector<2x128xf32>
    %149 = vector.extract_strided_slice %147 {offsets = [0, 0], sizes = [2, 32], strides = [1, 1]} : vector<2x128xf32> to vector<2x32xf32>
    %150 = vector.extract_strided_slice %147 {offsets = [0, 32], sizes = [2, 32], strides = [1, 1]} : vector<2x128xf32> to vector<2x32xf32>
    %151 = vector.extract_strided_slice %148 {offsets = [0, 64], sizes = [2, 32], strides = [1, 1]} : vector<2x128xf32> to vector<2x32xf32>
    %152 = vector.extract_strided_slice %147 {offsets = [0, 96], sizes = [2, 32], strides = [1, 1]} : vector<2x128xf32> to vector<2x32xf32>
    %153 = arith.mulf %150, %134 : vector<2x32xf32>
    %154 = arith.mulf %149, %151 : vector<2x32xf32>
    %155 = arith.addf %153, %154 : vector<2x32xf32>
    %156 = math.tanh %155 : vector<2x32xf32>
    %157 = arith.mulf %152, %156 : vector<2x32xf32>
    %158 = vector.shape_cast %157 : vector<2x32xf32> to vector<2x1x32xf32>
    %c0_41 = arith.constant 0 : index
    %c6 = arith.constant 6 : index
    %c0_42 = arith.constant 0 : index
    %159 = vector.load %arg7[%c0_41, %c6, %c0_42] : memref<2x8x32xf32, #tpu.memory_space<vmem>>, vector<2x1x32xf32>
    tpu.vector_store %arg7[%c0_41, %c6, %c0_42], %158 {strides = array<i32>} : memref<2x8x32xf32, #tpu.memory_space<vmem>>, vector<2x1x32xf32>,
    %cst_43 = arith.constant dense<0.000000e+00> : vector<2x128xf32>
    %160 = tpu.matmul %157, %1, %cst_43 {dimension_numbers = #tpu.dot_dimension_numbers<[1], [0], [0], [1], [0, 0, 1, 1], [], []>} : vector<2x32xf32>, vector<32x128xf32>, vector<2x128xf32> -> vector<2x128xf32>
    %161 = vector.extract_strided_slice %8 {offsets = [0, 7, 0], sizes = [2, 1, 128], strides = [1, 1, 1]} : vector<2x8x128xf32> to vector<2x1x128xf32>
    %162 = vector.shape_cast %161 : vector<2x1x128xf32> to vector<2x128xf32>
    %163 = arith.addf %160, %162 : vector<2x128xf32>
    %164 = arith.negf %163 : vector<2x128xf32>
    %165 = math.exp %164 : vector<2x128xf32>
    %cst_44 = arith.constant 1.000000e+00 : f32
    %166 = vector.broadcast %cst_44 : f32 to vector<2x128xf32>
    %167 = arith.addf %166, %165 : vector<2x128xf32>
    %168 = arith.divf %166, %167 : vector<2x128xf32>
    %169 = math.tanh %163 : vector<2x128xf32>
    %170 = vector.extract_strided_slice %168 {offsets = [0, 0], sizes = [2, 32], strides = [1, 1]} : vector<2x128xf32> to vector<2x32xf32>
    %171 = vector.extract_strided_slice %168 {offsets = [0, 32], sizes = [2, 32], strides = [1, 1]} : vector<2x128xf32> to vector<2x32xf32>
    %172 = vector.extract_strided_slice %169 {offsets = [0, 64], sizes = [2, 32], strides = [1, 1]} : vector<2x128xf32> to vector<2x32xf32>
    %173 = vector.extract_strided_slice %168 {offsets = [0, 96], sizes = [2, 32], strides = [1, 1]} : vector<2x128xf32> to vector<2x32xf32>
    %174 = arith.mulf %171, %155 : vector<2x32xf32>
    %175 = arith.mulf %170, %172 : vector<2x32xf32>
    %176 = arith.addf %174, %175 : vector<2x32xf32>
    %177 = math.tanh %176 : vector<2x32xf32>
    %178 = arith.mulf %173, %177 : vector<2x32xf32>
    %179 = vector.shape_cast %178 : vector<2x32xf32> to vector<2x1x32xf32>
    %c0_45 = arith.constant 0 : index
    %c7 = arith.constant 7 : index
    %c0_46 = arith.constant 0 : index
    %180 = vector.load %arg7[%c0_45, %c7, %c0_46] : memref<2x8x32xf32, #tpu.memory_space<vmem>>, vector<2x1x32xf32>
    tpu.vector_store %arg7[%c0_45, %c7, %c0_46], %179 {strides = array<i32>} : memref<2x8x32xf32, #tpu.memory_space<vmem>>, vector<2x1x32xf32>,
    %181 = vector.shape_cast %178 : vector<2x32xf32> to vector<1x2x32xf32>
    %c0_47 = arith.constant 0 : index
    %c0_48 = arith.constant 0 : index
    %c0_49 = arith.constant 0 : index
    %182 = vector.load %arg8[%c0_47, %c0_48, %c0_49] : memref<1x2x32xf32, #tpu.memory_space<vmem>>, vector<1x2x32xf32>
    tpu.vector_store %arg8[%c0_47, %c0_48, %c0_49], %181 {strides = array<i32>} : memref<1x2x32xf32, #tpu.memory_space<vmem>>, vector<1x2x32xf32>,
    %183 = vector.shape_cast %176 : vector<2x32xf32> to vector<1x2x32xf32>
    %c0_50 = arith.constant 0 : index
    %c0_51 = arith.constant 0 : index
    %c0_52 = arith.constant 0 : index
    %184 = vector.load %arg9[%c0_50, %c0_51, %c0_52] : memref<1x2x32xf32, #tpu.memory_space<vmem>>, vector<1x2x32xf32>
    tpu.vector_store %arg9[%c0_50, %c0_51, %c0_52], %183 {strides = array<i32>} : memref<1x2x32xf32, #tpu.memory_space<vmem>>, vector<1x2x32xf32>,
    return
  }
  func.func @transform_0(%arg0: i32) -> (i32, i32, i32) {
    %c0_i32 = arith.constant 0 : i32
    %c0_i32_0 = arith.constant 0 : i32
    %c0_i32_1 = arith.constant 0 : i32
    %c0_i32_2 = arith.constant 0 : i32
    return %c0_i32, %c0_i32_0, %c0_i32_1 : i32, i32, i32
  }
  func.func @transform_1(%arg0: i32) -> (i32, i32, i32) {
    %c0_i32 = arith.constant 0 : i32
    %c0_i32_0 = arith.constant 0 : i32
    %c0_i32_1 = arith.constant 0 : i32
    %c0_i32_2 = arith.constant 0 : i32
    return %c0_i32, %c0_i32_0, %c0_i32_1 : i32, i32, i32
  }
  func.func @transform_2(%arg0: i32) -> (i32, i32, i32) {
    %c0_i32 = arith.constant 0 : i32
    %c0_i32_0 = arith.constant 0 : i32
    %c0_i32_1 = arith.constant 0 : i32
    %c0_i32_2 = arith.constant 0 : i32
    return %c0_i32, %c0_i32_0, %c0_i32_1 : i32, i32, i32
  }
  func.func @transform_3(%arg0: i32) -> (i32, i32) {
    %c0_i32 = arith.constant 0 : i32
    %c0_i32_0 = arith.constant 0 : i32
    %c0_i32_1 = arith.constant 0 : i32
    return %c0_i32, %c0_i32_0 : i32, i32
  }
  func.func @transform_4(%arg0: i32) -> (i32, i32) {
    %c0_i32 = arith.constant 0 : i32
    %c0_i32_0 = arith.constant 0 : i32
    %c0_i32_1 = arith.constant 0 : i32
    return %c0_i32, %c0_i32_0 : i32, i32
  }
  func.func @transform_5(%arg0: i32) -> (i32, i32) {
    %c0_i32 = arith.constant 0 : i32
    %c0_i32_0 = arith.constant 0 : i32
    %c0_i32_1 = arith.constant 0 : i32
    return %c0_i32, %c0_i32_0 : i32, i32
  }
  func.func @transform_6(%arg0: i32) -> (i32, i32, i32) {
    %c0_i32 = arith.constant 0 : i32
    %c0_i32_0 = arith.constant 0 : i32
    %c0_i32_1 = arith.constant 0 : i32
    %c0_i32_2 = arith.constant 0 : i32
    return %c0_i32, %c0_i32_0, %c0_i32_1 : i32, i32, i32
  }
  func.func @transform_7(%arg0: i32) -> (i32, i32, i32) {
    %c0_i32 = arith.constant 0 : i32
    %c0_i32_0 = arith.constant 0 : i32
    %c0_i32_1 = arith.constant 0 : i32
    %c0_i32_2 = arith.constant 0 : i32
    return %c0_i32, %c0_i32_0, %c0_i32_1 : i32, i32, i32
  }
  func.func @transform_8(%arg0: i32) -> (i32, i32, i32) {
    %c0_i32 = arith.constant 0 : i32
    %c0_i32_0 = arith.constant 0 : i32
    %c0_i32_1 = arith.constant 0 : i32
    %c0_i32_2 = arith.constant 0 : i32
    return %c0_i32, %c0_i32_0, %c0_i32_1 : i32, i32, i32
  }
}

</mosaic_0001>

<llo_original>
// kernel: lstm_text_encoder_forward.1
$region0: #{lstm_text_encoder_forward.1}
  #allocation0 [shape = 'u32[]', space=smem, size = 0x4, offset = 0x4, fixed_abs, tag = 'smem constant byte address 0x4 - core index']
  #allocation1 [shape = 'u32[72,128]{1,0:T(1,128)}', space=vmem, size = 0x9000, scoped, tag = 'internal scratch']
  %s0 = inlined_call_operand.hbm [shape: f32[2,8,32], index: 0, kind: input, shape index: {}]
  %s1 = inlined_call_operand.vmem [shape: f32[1,2,32], index: 1, kind: input, shape index: {}]
  %s2 = inlined_call_operand.hbm [shape: f32[1,2,32], index: 2, kind: input, shape index: {}]
  %s3 = inlined_call_operand.hbm [shape: f32[32,128], index: 3, kind: input, shape index: {}]
  %s4 = inlined_call_operand.hbm [shape: f32[32,128], index: 4, kind: input, shape index: {}]
  %s5 = inlined_call_operand.vmem [shape: f32[1,128], index: 5, kind: input, shape index: {}]
  %s6 = inlined_call_operand.hbm [shape: f32[2,8,32], index: 6, kind: output, shape index: {0}]
  %s7 = inlined_call_operand.hbm [shape: f32[1,2,32], index: 7, kind: output, shape index: {1}]
  %s8 = inlined_call_operand.hbm [shape: f32[1,2,32], index: 8, kind: output, shape index: {2}]
  %9 = xla_tuple %s6, %s7, %s8
  %s10 = sld [smem:[#allocation0]]
  $region66: #{lstm_text_encoder_forward.1} parent=0
    _
  %s12 = ssub.s32 1, %s10
  %s13 = scalar_select 0, %s12, %s10
  $region1: #{lstm_text_encoder_forward.1} parent=0
    #allocation2 [shape = 'u8[8192]{0}', space=vmem, size = 0x2000, scoped, tag = 'input window, operand 0, single buffered']
    #allocation3 [shape = 's32[1]{0}', space=sflag, size = 0x4, scoped, tag = 'scoped memory for lstm_text_encoder_forward.1']
    #allocation4 [shape = 's32[1]{0}', space=sflag, size = 0x4, scoped, tag = 'scoped memory for lstm_text_encoder_forward.1']
    #allocation5 [shape = 'u8[1024]{0}', space=vmem, size = 0x400, scoped, tag = 'input window, operand 2, single buffered']
    #allocation6 [shape = 's32[1]{0}', space=sflag, size = 0x4, scoped, tag = 'scoped memory for lstm_text_encoder_forward.1']
    #allocation7 [shape = 'u8[16384]{0}', space=vmem, size = 0x4000, scoped, tag = 'input window, operand 3, single buffered']
    #allocation8 [shape = 'u8[16384]{0}', space=vmem, size = 0x4000, scoped, tag = 'input window, operand 4, single buffered']
    #allocation9 [shape = 's32[1]{0}', space=sflag, size = 0x4, scoped, tag = 'scoped memory for lstm_text_encoder_forward.1']
    #allocation10 [shape = 'u8[8192]{0}', space=vmem, size = 0x2000, scoped, tag = 'output window, operand 0, single buffered']
    #allocation11 [shape = 'u8[1024]{0}', space=vmem, size = 0x400, scoped, tag = 'output window, operand 1, single buffered']
    #allocation12 [shape = 's32[1]{0}', space=sflag, size = 0x4, scoped, tag = 'scoped memory for lstm_text_encoder_forward.1']
    #allocation13 [shape = 'u8[1024]{0}', space=vmem, size = 0x400, scoped, tag = 'output window, operand 2, single buffered']
    %14 = vsyncpa [#allocation3], 0
    %15 = vsyncpa [#allocation6], 0
    %16 = vsyncpa [#allocation9], 0
    %17 = vsyncpa [#allocation4], 0
    %18 = vsyncpa [#allocation12], 0
    // Predicated region
    $region2: #{lstm_text_encoder_forward.1} parent=1 // pred_check
      _
    $region3: #{lstm_text_encoder_forward.1} parent=1 // pred_check_branch
      %20 = sbr.rel (0) target = $region5
    $region4: #{lstm_text_encoder_forward.1} parent=1 // pred_region
      %22 = vsyncadd [#allocation3], 0
      %s23 = sshll.u32 %s0, 4
      %s24 = int_to_ptr.hbm [resolvable:$true] %s23
      %s25 = sshll.u32 [#allocation2], 4
      %s26 = int_to_ptr.vmem [resolvable:$true] %s25
      %31 = dma.hbm_to_vmem [thread:$0]  %s24, 256, %s26, [#allocation3], 128, 128, 8
    $region5: #{lstm_text_encoder_forward.1} parent=1 // pred_fallthru
      _
    // Predicated region
    $region6: #{lstm_text_encoder_forward.1} parent=1 // pred_check
      _
    $region7: #{lstm_text_encoder_forward.1} parent=1 // pred_check_branch
      %33 = sbr.rel (0) target = $region9
    $region8: #{lstm_text_encoder_forward.1} parent=1 // pred_region
      _
    $region9: #{lstm_text_encoder_forward.1} parent=1 // pred_fallthru
      _
    // Predicated region
    $region10: #{lstm_text_encoder_forward.1} parent=1 // pred_check
      _
    $region11: #{lstm_text_encoder_forward.1} parent=1 // pred_check_branch
      %35 = sbr.rel (0) target = $region13
    $region12: #{lstm_text_encoder_forward.1} parent=1 // pred_region
      %37 = vsyncadd [#allocation6], 0
      %s39 = sshll.u32 %s2, 4
      %s40 = int_to_ptr.hbm [resolvable:$true] %s39
      %s41 = sshll.u32 [#allocation5], 4
      %s42 = int_to_ptr.vmem [resolvable:$true] %s41
      %44 = dma.hbm_to_vmem [thread:$0]  %s40, 32, %s42, [#allocation6]
    $region13: #{lstm_text_encoder_forward.1} parent=1 // pred_fallthru
      _
    // Predicated region
    $region14: #{lstm_text_encoder_forward.1} parent=1 // pred_check
      _
    $region15: #{lstm_text_encoder_forward.1} parent=1 // pred_check_branch
      %46 = sbr.rel (0) target = $region17
    $region16: #{lstm_text_encoder_forward.1} parent=1 // pred_region
      %48 = vsyncadd [#allocation6], 0
      %s49 = sshll.u32 %s3, 4
      %s50 = int_to_ptr.hbm [resolvable:$true] %s49
      %s51 = sshll.u32 [#allocation7], 4
      %s52 = int_to_ptr.vmem [resolvable:$true] %s51
      %57 = dma.hbm_to_vmem [thread:$0]  %s50, 512, %s52, [#allocation6], 128, 128, 8
    $region17: #{lstm_text_encoder_forward.1} parent=1 // pred_fallthru
      _
    // Predicated region
    $region18: #{lstm_text_encoder_forward.1} parent=1 // pred_check
      _
    $region19: #{lstm_text_encoder_forward.1} parent=1 // pred_check_branch
      %59 = sbr.rel (0) target = $region21
    $region20: #{lstm_text_encoder_forward.1} parent=1 // pred_region
      %61 = vsyncadd [#allocation9], 0
      %s62 = sshll.u32 %s4, 4
      %s63 = int_to_ptr.hbm [resolvable:$true] %s62
      %s64 = sshll.u32 [#allocation8], 4
      %s65 = int_to_ptr.vmem [resolvable:$true] %s64
      %70 = dma.hbm_to_vmem [thread:$0]  %s63, 512, %s65, [#allocation9], 128, 128, 8
    $region21: #{lstm_text_encoder_forward.1} parent=1 // pred_fallthru
      _
    // Predicated region
    $region22: #{lstm_text_encoder_forward.1} parent=1 // pred_check
      _
    $region23: #{lstm_text_encoder_forward.1} parent=1 // pred_check_branch
      %72 = sbr.rel (0) target = $region25
    $region24: #{lstm_text_encoder_forward.1} parent=1 // pred_region
      _
    $region25: #{lstm_text_encoder_forward.1} parent=1 // pred_fallthru
      _
    // Predicated region
    $region26: #{lstm_text_encoder_forward.1} parent=1 // pred_check
      _
    $region27: #{lstm_text_encoder_forward.1} parent=1 // pred_check_branch
      %74 = sbr.rel (0) target = $region29
    $region28: #{lstm_text_encoder_forward.1} parent=1 // pred_region
      %76 = dma.done [#allocation3], 256
    $region29: #{lstm_text_encoder_forward.1} parent=1 // pred_fallthru
      _
    // Predicated region
    $region30: #{lstm_text_encoder_forward.1} parent=1 // pred_check
      _
    $region31: #{lstm_text_encoder_forward.1} parent=1 // pred_check_branch
      %78 = sbr.rel (0) target = $region33
    $region32: #{lstm_text_encoder_forward.1} parent=1 // pred_region
      %80 = dma.done [#allocation6], 32
    $region33: #{lstm_text_encoder_forward.1} parent=1 // pred_fallthru
      _
    // Predicated region
    $region34: #{lstm_text_encoder_forward.1} parent=1 // pred_check
      _
    $region35: #{lstm_text_encoder_forward.1} parent=1 // pred_check_branch
      %82 = sbr.rel (0) target = $region37
    $region36: #{lstm_text_encoder_forward.1} parent=1 // pred_region
      %84 = dma.done [#allocation6], 512
    $region37: #{lstm_text_encoder_forward.1} parent=1 // pred_fallthru
      _
    // Predicated region
    $region38: #{lstm_text_encoder_forward.1} parent=1 // pred_check
      _
    $region39: #{lstm_text_encoder_forward.1} parent=1 // pred_check_branch
      %86 = sbr.rel (0) target = $region41
    $region40: #{lstm_text_encoder_forward.1} parent=1 // pred_region
      %88 = dma.done [#allocation9], 512
    $region41: #{lstm_text_encoder_forward.1} parent=1 // pred_fallthru
      _
    %v89 = vld [vmem:[#allocation7] sm:$0xff]
    %v90 = vld [vmem:[#allocation7 + $0x8] sm:$0xff]
    %v91 = vld [vmem:[#allocation7 + $0x10] sm:$0xff]
    %v92 = vld [vmem:[#allocation7 + $0x18] sm:$0xff]
    %v93 = vld [vmem:[#allocation8] sm:$0xff]
    %v94 = vld [vmem:[#allocation8 + $0x8] sm:$0xff]
    %v95 = vld [vmem:[#allocation8 + $0x10] sm:$0xff]
    %v96 = vld [vmem:[#allocation8 + $0x18] sm:$0xff]
    %v97 = vld [vmem:[%s5] sm:$0x1]
    %v98 = vld [vmem:[#allocation2] sm:$0xff]
    %v99 = vld [vmem:[#allocation2 + $0x8] sm:$0xff]
    %v101 = vperm.slane %v97, 0
    %vm103 = vcmask 261120
    %v105 = vsel %vm103, %v98, 0
    %v108 = vsel %vm103, %v99, 0
    %110 = vmatpush.msra.mxu0 0.0
    %111 = vmatpush.msra.mxu0 0.0
    %112 = vmatpush.msra.mxu0 0.0
    %113 = vmatpush.msra.mxu0 0.0
    %114 = vmatpush.msra.mxu0 0.0
    %115 = vmatpush.msra.mxu0 0.0
    %116 = vmatpush.msra.mxu0 0.0
    %117 = vmatpush.msra.mxu0 0.0
    %118 = vmatpush.msra.mxu0 0.0
    %119 = vmatpush.msra.mxu0 0.0
    %120 = vmatpush.msra.mxu0 0.0
    %121 = vmatpush.msra.mxu0 0.0
    %122 = vmatpush.msra.mxu0 %v92
    %123 = vmatpush.msra.mxu0 %v91
    %124 = vmatpush.msra.mxu0 %v90
    %125 = vmatpush.msra.mxu0 %v89
    %126 = vmatmul.f32.gmra.mxu0 %v105
    %v127 = vpop.f32.mrf.mxu0
    %v128 = vadd.f32 %v101, %v127
    %129 = vmatmul.f32.gmra.mxu0 %v108
    %v130 = vpop.f32.mrf.mxu0
    %v131 = vadd.f32 %v101, %v130
    %132 = vdwg.mxu0
    %v133 = vld [vmem:[%s1] sm:$0x3]
    %v134 = vld [vmem:[#allocation5] sm:$0x3]
    %v137 = vrot.slane %v131, 7
    %vm138 = vcmask 1041409
    %v139 = vsel %vm138, %v137, %v128
    %v142 = vsel %vm103, %v133, 0
    %144 = vmatpush.msra.mxu0 0.0
    %145 = vmatpush.msra.mxu0 0.0
    %146 = vmatpush.msra.mxu0 0.0
    %147 = vmatpush.msra.mxu0 0.0
    %148 = vmatpush.msra.mxu0 0.0
    %149 = vmatpush.msra.mxu0 0.0
    %150 = vmatpush.msra.mxu0 0.0
    %151 = vmatpush.msra.mxu0 0.0
    %152 = vmatpush.msra.mxu0 0.0
    %153 = vmatpush.msra.mxu0 0.0
    %154 = vmatpush.msra.mxu0 0.0
    %155 = vmatpush.msra.mxu0 0.0
    %156 = vmatpush.msra.mxu0 %v96
    %157 = vmatpush.msra.mxu0 %v95
    %158 = vmatpush.msra.mxu0 %v94
    %159 = vmatpush.msra.mxu0 %v93
    %160 = vmatmul.f32.gmra.mxu0 %v142
    %v161 = vpop.f32.mrf.mxu0
    %v162 = vadd.f32 %v139, %v161
    %163 = vdwg.mxu0
    %v164 = vxor.u32 %v162, 2147483648
    %v165 = vmul.f32 %v164, 1.442695
    %v166 = vpow.pop %v165
    %v167 = vadd.f32 %v166, 1.0
    %v168 = vrcp.pop %v167
    %v169 = vmul.f32 %v167, %v168
    %v170 = vsub.f32 1.0, %v169
    %v171 = vmul.f32 %v168, %v170
    %v172 = vadd.f32 %v168, %v171
    %vm173 = vweird.f32 %v167
    %vm174 = vweird.f32 %v168
    %vm175 = vmor %vm173, %vm174
    %v176 = vsel %vm175, %v168, %v172
    %v177 = vand.u32 2147483647, %v167
    %vm178 = vcmp.eq.f32.partialorder %v177, 8.507059e+37
    %v179 = vand.u32 %v167, 2147483648
    %v180 = vor.u32 1.1754944e-38, %v179
    %v181 = vsel %vm178, %v180, %v176
    %v182 = vmul.f32 1.0, %v181
    %v183 = vtanh.pop %v162
    %185 = vrot.lane.b32.xlu0 %v134, 32
    %v186 = vpop.permute.xlu0 %185
    %v188 = vmul.f32 %v182, %v186
    %190 = vrot.lane.b32.xlu0 %v183, 64
    %v191 = vpop.permute.xlu0 %190
    %v193 = vmul.f32 %v182, %v191
    %195 = vrot.lane.b32.xlu0 %v193, 32
    %v196 = vpop.permute.xlu0 %195
    %v198 = vadd.f32 %v188, %v196
    %v199 = vtanh.pop %v198
    %201 = vrot.lane.b32.xlu0 %v199, 64
    %v202 = vpop.permute.xlu0 %201
    %v204 = vmul.f32 %v182, %v202
    %v206 = vrot.slane %v204, 1
    %v207 = vperm.slane %v204, 0
    %v208 = vperm.slane %v206, 0
    %209 = vrot.lane.b32.xlu0 %v207, 32
    %v210 = vpop.permute.xlu0 %209
    %211 = vrot.lane.b32.xlu0 %v208, 32
    %v212 = vpop.permute.xlu0 %211
    %vm215 = vcmask 253952
    %216 = vst.msk [vmem:[#allocation10] sm:$0x1] %vm215, %v210
    %217 = vst.msk [vmem:[#allocation10 + $0x8] sm:$0x1] %vm215, %v212
    %218 = vrot.lane.b32.xlu0 %v204, 32
    %v219 = vpop.permute.xlu0 %218
    %v220 = vrot.slane %v128, 1
    %v221 = vsel %vm138, %v131, %v220
    %v223 = vsel %vm103, %v219, 0
    %225 = vmatpush.msra.mxu0 0.0
    %226 = vmatpush.msra.mxu0 0.0
    %227 = vmatpush.msra.mxu0 0.0
    %228 = vmatpush.msra.mxu0 0.0
    %229 = vmatpush.msra.mxu0 0.0
    %230 = vmatpush.msra.mxu0 0.0
    %231 = vmatpush.msra.mxu0 0.0
    %232 = vmatpush.msra.mxu0 0.0
    %233 = vmatpush.msra.mxu0 0.0
    %234 = vmatpush.msra.mxu0 0.0
    %235 = vmatpush.msra.mxu0 0.0
    %236 = vmatpush.msra.mxu0 0.0
    %237 = vmatpush.msra.mxu0 %v96
    %238 = vmatpush.msra.mxu0 %v95
    %239 = vmatpush.msra.mxu0 %v94
    %240 = vmatpush.msra.mxu0 %v93
    %241 = vmatmul.f32.gmra.mxu0 %v223
    %v242 = vpop.f32.mrf.mxu0
    %v243 = vadd.f32 %v221, %v242
    %244 = vdwg.mxu0
    %v245 = vxor.u32 %v243, 2147483648
    %v246 = vmul.f32 %v245, 1.442695
    %v247 = vpow.pop %v246
    %v248 = vadd.f32 %v247, 1.0
    %v249 = vrcp.pop %v248
    %v250 = vmul.f32 %v248, %v249
    %v251 = vsub.f32 1.0, %v250
    %v252 = vmul.f32 %v249, %v251
    %v253 = vadd.f32 %v249, %v252
    %vm254 = vweird.f32 %v248
    %vm255 = vweird.f32 %v249
    %vm256 = vmor %vm254, %vm255
    %v257 = vsel %vm256, %v249, %v253
    %v258 = vand.u32 2147483647, %v248
    %vm259 = vcmp.eq.f32.partialorder %v258, 8.507059e+37
    %v260 = vand.u32 %v248, 2147483648
    %v261 = vor.u32 1.1754944e-38, %v260
    %v262 = vsel %vm259, %v261, %v257
    %v263 = vmul.f32 1.0, %v262
    %v264 = vtanh.pop %v243
    %v265 = vmul.f32 %v263, %v198
    %267 = vrot.lane.b32.xlu0 %v264, 64
    %v268 = vpop.permute.xlu0 %267
    %v270 = vmul.f32 %v263, %v268
    %272 = vrot.lane.b32.xlu0 %v270, 32
    %v273 = vpop.permute.xlu0 %272
    %v275 = vadd.f32 %v265, %v273
    %v276 = vtanh.pop %v275
    %278 = vrot.lane.b32.xlu0 %v276, 64
    %v279 = vpop.permute.xlu0 %278
    %v281 = vmul.f32 %v263, %v279
    %v283 = vrot.slane %v281, 1
    %v284 = vperm.slane %v281, 0
    %v285 = vperm.slane %v283, 0
    %286 = vrot.lane.b32.xlu0 %v284, 32
    %v287 = vpop.permute.xlu0 %286
    %288 = vrot.lane.b32.xlu0 %v285, 32
    %v289 = vpop.permute.xlu0 %288
    %292 = vst.msk [vmem:[#allocation10 + $0x1] sm:$0x1] %vm215, %v287
    %293 = vst.msk [vmem:[#allocation10 + $0x9] sm:$0x1] %vm215, %v289
    %294 = vrot.lane.b32.xlu0 %v281, 32
    %v295 = vpop.permute.xlu0 %294
    %v296 = vrot.slane %v128, 2
    %v297 = vrot.slane %v131, 1
    %v298 = vsel %vm138, %v297, %v296
    %v300 = vsel %vm103, %v295, 0
    %302 = vmatpush.msra.mxu0 0.0
    %303 = vmatpush.msra.mxu0 0.0
    %304 = vmatpush.msra.mxu0 0.0
    %305 = vmatpush.msra.mxu0 0.0
    %306 = vmatpush.msra.mxu0 0.0
    %307 = vmatpush.msra.mxu0 0.0
    %308 = vmatpush.msra.mxu0 0.0
    %309 = vmatpush.msra.mxu0 0.0
    %310 = vmatpush.msra.mxu0 0.0
    %311 = vmatpush.msra.mxu0 0.0
    %312 = vmatpush.msra.mxu0 0.0
    %313 = vmatpush.msra.mxu0 0.0
    %314 = vmatpush.msra.mxu0 %v96
    %315 = vmatpush.msra.mxu0 %v95
    %316 = vmatpush.msra.mxu0 %v94
    %317 = vmatpush.msra.mxu0 %v93
    %318 = vmatmul.f32.gmra.mxu0 %v300
    %v319 = vpop.f32.mrf.mxu0
    %v320 = vadd.f32 %v298, %v319
    %321 = vdwg.mxu0
    %v322 = vxor.u32 %v320, 2147483648
    %v323 = vmul.f32 %v322, 1.442695
    %v324 = vpow.pop %v323
    %v325 = vadd.f32 %v324, 1.0
    %v326 = vrcp.pop %v325
    %v327 = vmul.f32 %v325, %v326
    %v328 = vsub.f32 1.0, %v327
    %v329 = vmul.f32 %v326, %v328
    %v330 = vadd.f32 %v326, %v329
    %vm331 = vweird.f32 %v325
    %vm332 = vweird.f32 %v326
    %vm333 = vmor %vm331, %vm332
    %v334 = vsel %vm333, %v326, %v330
    %v335 = vand.u32 2147483647, %v325
    %vm336 = vcmp.eq.f32.partialorder %v335, 8.507059e+37
    %v337 = vand.u32 %v325, 2147483648
    %v338 = vor.u32 1.1754944e-38, %v337
    %v339 = vsel %vm336, %v338, %v334
    %v340 = vmul.f32 1.0, %v339
    %v341 = vtanh.pop %v320
    %v342 = vmul.f32 %v340, %v275
    %344 = vrot.lane.b32.xlu0 %v341, 64
    %v345 = vpop.permute.xlu0 %344
    %v347 = vmul.f32 %v340, %v345
    %349 = vrot.lane.b32.xlu0 %v347, 32
    %v350 = vpop.permute.xlu0 %349
    %v352 = vadd.f32 %v342, %v350
    %v353 = vtanh.pop %v352
    %355 = vrot.lane.b32.xlu0 %v353, 64
    %v356 = vpop.permute.xlu0 %355
    %v358 = vmul.f32 %v340, %v356
    %v360 = vrot.slane %v358, 1
    %v361 = vperm.slane %v358, 0
    %v362 = vperm.slane %v360, 0
    %363 = vrot.lane.b32.xlu0 %v361, 32
    %v364 = vpop.permute.xlu0 %363
    %365 = vrot.lane.b32.xlu0 %v362, 32
    %v366 = vpop.permute.xlu0 %365
    %369 = vst.msk [vmem:[#allocation10 + $0x2] sm:$0x1] %vm215, %v364
    %370 = vst.msk [vmem:[#allocation10 + $0xa] sm:$0x1] %vm215, %v366
    %371 = vrot.lane.b32.xlu0 %v358, 32
    %v372 = vpop.permute.xlu0 %371
    %v373 = vrot.slane %v128, 3
    %v374 = vrot.slane %v131, 2
    %v375 = vsel %vm138, %v374, %v373
    %v377 = vsel %vm103, %v372, 0
    %379 = vmatpush.msra.mxu0 0.0
    %380 = vmatpush.msra.mxu0 0.0
    %381 = vmatpush.msra.mxu0 0.0
    %382 = vmatpush.msra.mxu0 0.0
    %383 = vmatpush.msra.mxu0 0.0
    %384 = vmatpush.msra.mxu0 0.0
    %385 = vmatpush.msra.mxu0 0.0
    %386 = vmatpush.msra.mxu0 0.0
    %387 = vmatpush.msra.mxu0 0.0
    %388 = vmatpush.msra.mxu0 0.0
    %389 = vmatpush.msra.mxu0 0.0
    %390 = vmatpush.msra.mxu0 0.0
    %391 = vmatpush.msra.mxu0 %v96
    %392 = vmatpush.msra.mxu0 %v95
    %393 = vmatpush.msra.mxu0 %v94
    %394 = vmatpush.msra.mxu0 %v93
    %395 = vmatmul.f32.gmra.mxu0 %v377
    %v396 = vpop.f32.mrf.mxu0
    %v397 = vadd.f32 %v375, %v396
    %398 = vdwg.mxu0
    %v399 = vxor.u32 %v397, 2147483648
    %v400 = vmul.f32 %v399, 1.442695
    %v401 = vpow.pop %v400
    %v402 = vadd.f32 %v401, 1.0
    %v403 = vrcp.pop %v402
    %v404 = vmul.f32 %v402, %v403
    %v405 = vsub.f32 1.0, %v404
    %v406 = vmul.f32 %v403, %v405
    %v407 = vadd.f32 %v403, %v406
    %vm408 = vweird.f32 %v402
    %vm409 = vweird.f32 %v403
    %vm410 = vmor %vm408, %vm409
    %v411 = vsel %vm410, %v403, %v407
    %v412 = vand.u32 2147483647, %v402
    %vm413 = vcmp.eq.f32.partialorder %v412, 8.507059e+37
    %v414 = vand.u32 %v402, 2147483648
    %v415 = vor.u32 1.1754944e-38, %v414
    %v416 = vsel %vm413, %v415, %v411
    %v417 = vmul.f32 1.0, %v416
    %v418 = vtanh.pop %v397
    %v419 = vmul.f32 %v417, %v352
    %421 = vrot.lane.b32.xlu0 %v418, 64
    %v422 = vpop.permute.xlu0 %421
    %v424 = vmul.f32 %v417, %v422
    %426 = vrot.lane.b32.xlu0 %v424, 32
    %v427 = vpop.permute.xlu0 %426
    %v429 = vadd.f32 %v419, %v427
    %v430 = vtanh.pop %v429
    %432 = vrot.lane.b32.xlu0 %v430, 64
    %v433 = vpop.permute.xlu0 %432
    %v435 = vmul.f32 %v417, %v433
    %v437 = vrot.slane %v435, 1
    %v438 = vperm.slane %v435, 0
    %v439 = vperm.slane %v437, 0
    %440 = vrot.lane.b32.xlu0 %v438, 32
    %v441 = vpop.permute.xlu0 %440
    %442 = vrot.lane.b32.xlu0 %v439, 32
    %v443 = vpop.permute.xlu0 %442
    %446 = vst.msk [vmem:[#allocation10 + $0x3] sm:$0x1] %vm215, %v441
    %447 = vst.msk [vmem:[#allocation10 + $0xb] sm:$0x1] %vm215, %v443
    %448 = vrot.lane.b32.xlu0 %v435, 32
    %v449 = vpop.permute.xlu0 %448
    %v450 = vrot.slane %v128, 4
    %v451 = vrot.slane %v131, 3
    %v452 = vsel %vm138, %v451, %v450
    %v454 = vsel %vm103, %v449, 0
    %456 = vmatpush.msra.mxu0 0.0
    %457 = vmatpush.msra.mxu0 0.0
    %458 = vmatpush.msra.mxu0 0.0
    %459 = vmatpush.msra.mxu0 0.0
    %460 = vmatpush.msra.mxu0 0.0
    %461 = vmatpush.msra.mxu0 0.0
    %462 = vmatpush.msra.mxu0 0.0
    %463 = vmatpush.msra.mxu0 0.0
    %464 = vmatpush.msra.mxu0 0.0
    %465 = vmatpush.msra.mxu0 0.0
    %466 = vmatpush.msra.mxu0 0.0
    %467 = vmatpush.msra.mxu0 0.0
    %468 = vmatpush.msra.mxu0 %v96
    %469 = vmatpush.msra.mxu0 %v95
    %470 = vmatpush.msra.mxu0 %v94
    %471 = vmatpush.msra.mxu0 %v93
    %472 = vmatmul.f32.gmra.mxu0 %v454
    %v473 = vpop.f32.mrf.mxu0
    %v474 = vadd.f32 %v452, %v473
    %475 = vdwg.mxu0
    %v476 = vxor.u32 %v474, 2147483648
    %v477 = vmul.f32 %v476, 1.442695
    %v478 = vpow.pop %v477
    %v479 = vadd.f32 %v478, 1.0
    %v480 = vrcp.pop %v479
    %v481 = vmul.f32 %v479, %v480
    %v482 = vsub.f32 1.0, %v481
    %v483 = vmul.f32 %v480, %v482
    %v484 = vadd.f32 %v480, %v483
    %vm485 = vweird.f32 %v479
    %vm486 = vweird.f32 %v480
    %vm487 = vmor %vm485, %vm486
    %v488 = vsel %vm487, %v480, %v484
    %v489 = vand.u32 2147483647, %v479
    %vm490 = vcmp.eq.f32.partialorder %v489, 8.507059e+37
    %v491 = vand.u32 %v479, 2147483648
    %v492 = vor.u32 1.1754944e-38, %v491
    %v493 = vsel %vm490, %v492, %v488
    %v494 = vmul.f32 1.0, %v493
    %v495 = vtanh.pop %v474
    %v496 = vmul.f32 %v494, %v429
    %498 = vrot.lane.b32.xlu0 %v495, 64
    %v499 = vpop.permute.xlu0 %498
    %v501 = vmul.f32 %v494, %v499
    %503 = vrot.lane.b32.xlu0 %v501, 32
    %v504 = vpop.permute.xlu0 %503
    %v506 = vadd.f32 %v496, %v504
    %v507 = vtanh.pop %v506
    %509 = vrot.lane.b32.xlu0 %v507, 64
    %v510 = vpop.permute.xlu0 %509
    %v512 = vmul.f32 %v494, %v510
    %v514 = vrot.slane %v512, 1
    %v515 = vperm.slane %v512, 0
    %v516 = vperm.slane %v514, 0
    %517 = vrot.lane.b32.xlu0 %v515, 32
    %v518 = vpop.permute.xlu0 %517
    %519 = vrot.lane.b32.xlu0 %v516, 32
    %v520 = vpop.permute.xlu0 %519
    %523 = vst.msk [vmem:[#allocation10 + $0x4] sm:$0x1] %vm215, %v518
    %524 = vst.msk [vmem:[#allocation10 + $0xc] sm:$0x1] %vm215, %v520
    %525 = vrot.lane.b32.xlu0 %v512, 32
    %v526 = vpop.permute.xlu0 %525
    %v527 = vrot.slane %v128, 5
    %v528 = vrot.slane %v131, 4
    %v529 = vsel %vm138, %v528, %v527
    %v531 = vsel %vm103, %v526, 0
    %533 = vmatpush.msra.mxu0 0.0
    %534 = vmatpush.msra.mxu0 0.0
    %535 = vmatpush.msra.mxu0 0.0
    %536 = vmatpush.msra.mxu0 0.0
    %537 = vmatpush.msra.mxu0 0.0
    %538 = vmatpush.msra.mxu0 0.0
    %539 = vmatpush.msra.mxu0 0.0
    %540 = vmatpush.msra.mxu0 0.0
    %541 = vmatpush.msra.mxu0 0.0
    %542 = vmatpush.msra.mxu0 0.0
    %543 = vmatpush.msra.mxu0 0.0
    %544 = vmatpush.msra.mxu0 0.0
    %545 = vmatpush.msra.mxu0 %v96
    %546 = vmatpush.msra.mxu0 %v95
    %547 = vmatpush.msra.mxu0 %v94
    %548 = vmatpush.msra.mxu0 %v93
    %549 = vmatmul.f32.gmra.mxu0 %v531
    %v550 = vpop.f32.mrf.mxu0
    %v551 = vadd.f32 %v529, %v550
    %552 = vdwg.mxu0
    %v553 = vxor.u32 %v551, 2147483648
    %v554 = vmul.f32 %v553, 1.442695
    %v555 = vpow.pop %v554
    %v556 = vadd.f32 %v555, 1.0
    %v557 = vrcp.pop %v556
    %v558 = vmul.f32 %v556, %v557
    %v559 = vsub.f32 1.0, %v558
    %v560 = vmul.f32 %v557, %v559
    %v561 = vadd.f32 %v557, %v560
    %vm562 = vweird.f32 %v556
    %vm563 = vweird.f32 %v557
    %vm564 = vmor %vm562, %vm563
    %v565 = vsel %vm564, %v557, %v561
    %v566 = vand.u32 2147483647, %v556
    %vm567 = vcmp.eq.f32.partialorder %v566, 8.507059e+37
    %v568 = vand.u32 %v556, 2147483648
    %v569 = vor.u32 1.1754944e-38, %v568
    %v570 = vsel %vm567, %v569, %v565
    %v571 = vmul.f32 1.0, %v570
    %v572 = vtanh.pop %v551
    %v573 = vmul.f32 %v571, %v506
    %575 = vrot.lane.b32.xlu0 %v572, 64
    %v576 = vpop.permute.xlu0 %575
    %v578 = vmul.f32 %v571, %v576
    %580 = vrot.lane.b32.xlu0 %v578, 32
    %v581 = vpop.permute.xlu0 %580
    %v583 = vadd.f32 %v573, %v581
    %v584 = vtanh.pop %v583
    %586 = vrot.lane.b32.xlu0 %v584, 64
    %v587 = vpop.permute.xlu0 %586
    %v589 = vmul.f32 %v571, %v587
    %v591 = vrot.slane %v589, 1
    %v592 = vperm.slane %v589, 0
    %v593 = vperm.slane %v591, 0
    %594 = vrot.lane.b32.xlu0 %v592, 32
    %v595 = vpop.permute.xlu0 %594
    %596 = vrot.lane.b32.xlu0 %v593, 32
    %v597 = vpop.permute.xlu0 %596
    %600 = vst.msk [vmem:[#allocation10 + $0x5] sm:$0x1] %vm215, %v595
    %601 = vst.msk [vmem:[#allocation10 + $0xd] sm:$0x1] %vm215, %v597
    %602 = vrot.lane.b32.xlu0 %v589, 32
    %v603 = vpop.permute.xlu0 %602
    %v604 = vrot.slane %v128, 6
    %v605 = vrot.slane %v131, 5
    %v606 = vsel %vm138, %v605, %v604
    %v608 = vsel %vm103, %v603, 0
    %610 = vmatpush.msra.mxu0 0.0
    %611 = vmatpush.msra.mxu0 0.0
    %612 = vmatpush.msra.mxu0 0.0
    %613 = vmatpush.msra.mxu0 0.0
    %614 = vmatpush.msra.mxu0 0.0
    %615 = vmatpush.msra.mxu0 0.0
    %616 = vmatpush.msra.mxu0 0.0
    %617 = vmatpush.msra.mxu0 0.0
    %618 = vmatpush.msra.mxu0 0.0
    %619 = vmatpush.msra.mxu0 0.0
    %620 = vmatpush.msra.mxu0 0.0
    %621 = vmatpush.msra.mxu0 0.0
    %622 = vmatpush.msra.mxu0 %v96
    %623 = vmatpush.msra.mxu0 %v95
    %624 = vmatpush.msra.mxu0 %v94
    %625 = vmatpush.msra.mxu0 %v93
    %626 = vmatmul.f32.gmra.mxu0 %v608
    %v627 = vpop.f32.mrf.mxu0
    %v628 = vadd.f32 %v606, %v627
    %629 = vdwg.mxu0
    %v630 = vxor.u32 %v628, 2147483648
    %v631 = vmul.f32 %v630, 1.442695
    %v632 = vpow.pop %v631
    %v633 = vadd.f32 %v632, 1.0
    %v634 = vrcp.pop %v633
    %v635 = vmul.f32 %v633, %v634
    %v636 = vsub.f32 1.0, %v635
    %v637 = vmul.f32 %v634, %v636
    %v638 = vadd.f32 %v634, %v637
    %vm639 = vweird.f32 %v633
    %vm640 = vweird.f32 %v634
    %vm641 = vmor %vm639, %vm640
    %v642 = vsel %vm641, %v634, %v638
    %v643 = vand.u32 2147483647, %v633
    %vm644 = vcmp.eq.f32.partialorder %v643, 8.507059e+37
    %v645 = vand.u32 %v633, 2147483648
    %v646 = vor.u32 1.1754944e-38, %v645
    %v647 = vsel %vm644, %v646, %v642
    %v648 = vmul.f32 1.0, %v647
    %v649 = vtanh.pop %v628
    %v650 = vmul.f32 %v648, %v583
    %652 = vrot.lane.b32.xlu0 %v649, 64
    %v653 = vpop.permute.xlu0 %652
    %v655 = vmul.f32 %v648, %v653
    %657 = vrot.lane.b32.xlu0 %v655, 32
    %v658 = vpop.permute.xlu0 %657
    %v660 = vadd.f32 %v650, %v658
    %v661 = vtanh.pop %v660
    %663 = vrot.lane.b32.xlu0 %v661, 64
    %v664 = vpop.permute.xlu0 %663
    %v666 = vmul.f32 %v648, %v664
    %v668 = vrot.slane %v666, 1
    %v669 = vperm.slane %v666, 0
    %v670 = vperm.slane %v668, 0
    %671 = vrot.lane.b32.xlu0 %v669, 32
    %v672 = vpop.permute.xlu0 %671
    %673 = vrot.lane.b32.xlu0 %v670, 32
    %v674 = vpop.permute.xlu0 %673
    %677 = vst.msk [vmem:[#allocation10 + $0x6] sm:$0x1] %vm215, %v672
    %678 = vst.msk [vmem:[#allocation10 + $0xe] sm:$0x1] %vm215, %v674
    %679 = vrot.lane.b32.xlu0 %v666, 32
    %v680 = vpop.permute.xlu0 %679
    %v681 = vrot.slane %v128, 7
    %v682 = vrot.slane %v131, 6
    %v683 = vsel %vm138, %v682, %v681
    %v685 = vsel %vm103, %v680, 0
    %687 = vmatpush.msra.mxu0 0.0
    %688 = vmatpush.msra.mxu0 0.0
    %689 = vmatpush.msra.mxu0 0.0
    %690 = vmatpush.msra.mxu0 0.0
    %691 = vmatpush.msra.mxu0 0.0
    %692 = vmatpush.msra.mxu0 0.0
    %693 = vmatpush.msra.mxu0 0.0
    %694 = vmatpush.msra.mxu0 0.0
    %695 = vmatpush.msra.mxu0 0.0
    %696 = vmatpush.msra.mxu0 0.0
    %697 = vmatpush.msra.mxu0 0.0
    %698 = vmatpush.msra.mxu0 0.0
    %699 = vmatpush.msra.mxu0 %v96
    %700 = vmatpush.msra.mxu0 %v95
    %701 = vmatpush.msra.mxu0 %v94
    %702 = vmatpush.msra.mxu0 %v93
    %703 = vmatmul.f32.gmra.mxu0 %v685
    %v704 = vpop.f32.mrf.mxu0
    %v705 = vadd.f32 %v683, %v704
    %706 = vdwg.mxu0
    %v707 = vxor.u32 %v705, 2147483648
    %v708 = vmul.f32 %v707, 1.442695
    %v709 = vpow.pop %v708
    %v710 = vadd.f32 %v709, 1.0
    %v711 = vrcp.pop %v710
    %v712 = vmul.f32 %v710, %v711
    %v713 = vsub.f32 1.0, %v712
    %v714 = vmul.f32 %v711, %v713
    %v715 = vadd.f32 %v711, %v714
    %vm716 = vweird.f32 %v710
    %vm717 = vweird.f32 %v711
    %vm718 = vmor %vm716, %vm717
    %v719 = vsel %vm718, %v711, %v715
    %v720 = vand.u32 2147483647, %v710
    %vm721 = vcmp.eq.f32.partialorder %v720, 8.507059e+37
    %v722 = vand.u32 %v710, 2147483648
    %v723 = vor.u32 1.1754944e-38, %v722
    %v724 = vsel %vm721, %v723, %v719
    %v725 = vmul.f32 1.0, %v724
    %v726 = vtanh.pop %v705
    %v727 = vmul.f32 %v725, %v660
    %729 = vrot.lane.b32.xlu0 %v726, 64
    %v730 = vpop.permute.xlu0 %729
    %v732 = vmul.f32 %v725, %v730
    %734 = vrot.lane.b32.xlu0 %v732, 32
    %v735 = vpop.permute.xlu0 %734
    %v737 = vadd.f32 %v727, %v735
    %v738 = vtanh.pop %v737
    %740 = vrot.lane.b32.xlu0 %v738, 64
    %v741 = vpop.permute.xlu0 %740
    %v743 = vmul.f32 %v725, %v741
    %v745 = vrot.slane %v743, 1
    %v746 = vperm.slane %v743, 0
    %v747 = vperm.slane %v745, 0
    %748 = vrot.lane.b32.xlu0 %v746, 32
    %v749 = vpop.permute.xlu0 %748
    %750 = vrot.lane.b32.xlu0 %v747, 32
    %v751 = vpop.permute.xlu0 %750
    %754 = vst.msk [vmem:[#allocation10 + $0x7] sm:$0x1] %vm215, %v749
    %755 = vst.msk [vmem:[#allocation10 + $0xf] sm:$0x1] %vm215, %v751
    %756 = vrot.lane.b32.xlu0 %v743, 32
    %v757 = vpop.permute.xlu0 %756
    %vm759 = vcmask 254976
    %760 = vst.msk [vmem:[#allocation11] sm:$0x3] %vm759, %v757
    %762 = vrot.lane.b32.xlu0 %v737, 96
    %v763 = vpop.permute.xlu0 %762
    %765 = vst.msk [vmem:[#allocation13] sm:$0x3] %vm759, %v763
    // Predicated region
    $region42: #{lstm_text_encoder_forward.1} parent=1 // pred_check
      _
    $region43: #{lstm_text_encoder_forward.1} parent=1 // pred_check_branch
      %767 = sbr.rel (0) target = $region45
    $region44: #{lstm_text_encoder_forward.1} parent=1 // pred_region
      %769 = vsyncadd [#allocation4], 0
      %s770 = sshll.u32 [#allocation10], 4
      %s771 = int_to_ptr.vmem [resolvable:$true] %s770
      %s772 = sshll.u32 %s6, 4
      %s773 = int_to_ptr.hbm [resolvable:$true] %s772
      %778 = dma.vmem_to_hbm [thread:$0]  %s771, 256, %s773, [#allocation4], 128, 128, 8
    $region45: #{lstm_text_encoder_forward.1} parent=1 // pred_fallthru
      _
    // Predicated region
    $region46: #{lstm_text_encoder_forward.1} parent=1 // pred_check
      _
    $region47: #{lstm_text_encoder_forward.1} parent=1 // pred_check_branch
      %780 = sbr.rel (0) target = $region49
    $region48: #{lstm_text_encoder_forward.1} parent=1 // pred_region
      %782 = vsyncadd [#allocation12], 0
      %s784 = sshll.u32 [#allocation11], 4
      %s785 = int_to_ptr.vmem [resolvable:$true] %s784
      %s786 = sshll.u32 %s7, 4
      %s787 = int_to_ptr.hbm [resolvable:$true] %s786
      %789 = dma.vmem_to_hbm [thread:$0]  %s785, 32, %s787, [#allocation12]
    $region49: #{lstm_text_encoder_forward.1} parent=1 // pred_fallthru
      _
    // Predicated region
    $region50: #{lstm_text_encoder_forward.1} parent=1 // pred_check
      _
    $region51: #{lstm_text_encoder_forward.1} parent=1 // pred_check_branch
      %791 = sbr.rel (0) target = $region53
    $region52: #{lstm_text_encoder_forward.1} parent=1 // pred_region
      %793 = vsyncadd [#allocation12], 0
      %s795 = sshll.u32 [#allocation13], 4
      %s796 = int_to_ptr.vmem [resolvable:$true] %s795
      %s797 = sshll.u32 %s8, 4
      %s798 = int_to_ptr.hbm [resolvable:$true] %s797
      %800 = dma.vmem_to_hbm [thread:$0]  %s796, 32, %s798, [#allocation12]
    $region53: #{lstm_text_encoder_forward.1} parent=1 // pred_fallthru
      _
    // Predicated region
    $region54: #{lstm_text_encoder_forward.1} parent=1 // pred_check
      _
    $region55: #{lstm_text_encoder_forward.1} parent=1 // pred_check_branch
      %802 = sbr.rel (0) target = $region57
    $region56: #{lstm_text_encoder_forward.1} parent=1 // pred_region
      %804 = dma.done [#allocation4], 256
    $region57: #{lstm_text_encoder_forward.1} parent=1 // pred_fallthru
      _
    // Predicated region
    $region58: #{lstm_text_encoder_forward.1} parent=1 // pred_check
      _
    $region59: #{lstm_text_encoder_forward.1} parent=1 // pred_check_branch
      %806 = sbr.rel (0) target = $region61
    $region60: #{lstm_text_encoder_forward.1} parent=1 // pred_region
      %808 = dma.done [#allocation12], 32
    $region61: #{lstm_text_encoder_forward.1} parent=1 // pred_fallthru
      _
    // Predicated region
    $region62: #{lstm_text_encoder_forward.1} parent=1 // pred_check
      _
    $region63: #{lstm_text_encoder_forward.1} parent=1 // pred_check_branch
      %810 = sbr.rel (0) target = $region65
    $region64: #{lstm_text_encoder_forward.1} parent=1 // pred_region
      %812 = dma.done [#allocation12], 32
    $region65: #{lstm_text_encoder_forward.1} parent=1 // pred_fallthru
      _
    %813 = vsyncpa [#allocation3], 1
    %814 = vsyncpa [#allocation6], 1
    %815 = vsyncpa [#allocation9], 1
    %816 = vsyncpa [#allocation4], 1
    %817 = vsyncpa [#allocation12], 1

</llo_original>
